<compile_context>
chip_gen: v7x
topology: tpu7x:2x2x1
jax: 0.10.0
libtpu: 0.0.40
codegen_flags: <defaults>
</compile_context>

<pallas_src>
import jax
import jax.numpy as jnp
from jax.experimental import pallas as pl
from jax.experimental.pallas import tpu as pltpu

IMAGENET_MEAN = (0.485, 0.456, 0.406)
IMAGENET_STD = (0.229, 0.224, 0.225)


def _round_up(x, m):
    return ((x + m - 1) // m) * m


def _pick_tile(total, candidates):
    # `total` is always a multiple of 128, so the 128 fallback always divides.
    for c in candidates:
        if total % c == 0:
            return c
    return 128


# ----------------------------------------------------------------------------
# Fused kernel: clamp(x + noise, 0, 1) @ w_folded + b_folded
# Grid = (M // tm, Kp // tn, Dp // tk); reduction over the last axis with a
# resident f32 accumulator.
# ----------------------------------------------------------------------------
def _fused_freeat_kernel(x_ref, noise_ref, w_ref, b_ref, o_ref, acc_ref):
    k = pl.program_id(2)

    @pl.when(k == 0)
    def _():
        acc_ref[...] = jnp.zeros_like(acc_ref)

    # Elementwise preprocess in f32 (no bf16 VPU on v5e); mean/std already
    # folded into w/b, so this is the whole preprocessing. Cast at MXU input.
    a = jnp.clip(x_ref[...] + noise_ref[...], 0.0, 1.0)
    acc_ref[...] += jnp.dot(
        a.astype(jnp.bfloat16), w_ref[...], preferred_element_type=jnp.float32
    )

    # Bias is added exactly once, on the final reduction step.
    @pl.when(k == pl.num_programs(2) - 1)
    def _():
        o_ref[...] = (acc_ref[...] + b_ref[...]).astype(o_ref.dtype)


def fused_forward(x_flat, noise_flat, w_bf16, b_f32, *, tm, tn, tk):
    m, d = x_flat.shape
    _, kp = w_bf16.shape
    grid = (m // tm, kp // tn, d // tk)
    return pl.pallas_call(
        _fused_freeat_kernel,
        out_shape=jax.ShapeDtypeStruct((m, kp), jnp.float32),
        grid_spec=pltpu.PrefetchScalarGridSpec(
            num_scalar_prefetch=0,
            grid=grid,
            in_specs=[
                pl.BlockSpec((tm, tk), lambda i, j, k: (i, k)),   # x
                pl.BlockSpec((tm, tk), lambda i, j, k: (i, k)),   # noise
                pl.BlockSpec((tk, tn), lambda i, j, k: (k, j)),   # folded w (bf16)
                pl.BlockSpec((1, tn), lambda i, j, k: (0, j)),    # folded bias
            ],
            out_specs=pl.BlockSpec((tm, tn), lambda i, j, k: (i, j)),
            scratch_shapes=[pltpu.VMEM((tm, tn), jnp.float32)],
        ),
        compiler_params=pltpu.CompilerParams(
            dimension_semantics=("parallel", "parallel", "arbitrary"),
            vmem_limit_bytes=48 * 1024 * 1024,
        ),
    )(x_flat, noise_flat, w_bf16, b_f32)


# ----------------------------------------------------------------------------
# FreeAT module (wrapper / glue in plain JAX).
# ----------------------------------------------------------------------------
class FreeATPallas:
    def __init__(self, batch_size, image_dim, num_classes, key):
        self.batch_size = batch_size
        self.image_dim = image_dim
        self.num_classes = num_classes

        # global_noise_data: zeros buffer like the PyTorch module.
        self.global_noise_data = jnp.zeros(
            (batch_size, 3, image_dim, image_dim), dtype=jnp.float32
        )

        # Deterministic synthetic basic_model params (flatten -> linear).
        # TODO(synk): basic_model is injected in the original code; a real
        # backbone (e.g. ResNet) would need its own kernels.
        d = 3 * image_dim * image_dim
        kw, kb = jax.random.split(key)
        self.w = jax.random.normal(kw, (d, num_classes), jnp.float32) * 0.02
        self.b = jax.random.normal(kb, (1, num_classes), jnp.float32) * 0.02

        # Fold ImageNet normalization into the linear layer. Exact because the
        # clamp happens BEFORE the affine normalize:
        #   ((clamp - mean)/std) @ w + b
        #     == clamp @ (w * (1/std)) + (b - (mean/std) @ w)
        mean = jnp.asarray(IMAGENET_MEAN, jnp.float32)
        inv_std = 1.0 / jnp.asarray(IMAGENET_STD, jnp.float32)
        hw = image_dim * image_dim
        mean_flat = jnp.repeat(mean, hw)          # (D,) channel-major = NCHW flatten
        inv_std_flat = jnp.repeat(inv_std, hw)    # (D,)
        w_folded = self.w * inv_std_flat[:, None]
        b_folded = self.b - (mean_flat * inv_std_flat)[None, :] @ self.w

        # Pad to lane-dense, tileable shapes (multiples of 128 on D and K).
        self.d = d
        self.dp = _round_up(d, 128)
        self.kp = _round_up(num_classes, 128)
        w_p = jnp.zeros((self.dp, self.kp), jnp.float32)
        w_p = w_p.at[:d, :num_classes].set(w_folded)
        b_p = jnp.zeros((1, self.kp), jnp.float32)
        b_p = b_p.at[:, :num_classes].set(b_folded)
        self.w_folded_bf16 = w_p.astype(jnp.bfloat16)  # bf16 weight stream
        self.b_folded = b_p                            # keep bias in f32

        # Tile sizes: sized against v7x's smaller VMEM budget (still fine on
        # v5e/v6e; those could go deeper on tk).
        self.tk = _pick_tile(self.dp, (1024, 512, 256, 128))
        self.tn = _pick_tile(self.kp, (512, 256, 128))

    def __call__(self, x):
        n = x.shape[0]
        noise_batch = self.global_noise_data[:n]

        # Lane-dense flat layout (N, D), zero-padded to the tile grid.
        x_flat = x.reshape(n, -1)
        noise_flat = noise_batch.reshape(n, -1)
        np8 = _round_up(n, 8)
        tm = min(128, np8)
        npad = _round_up(np8, tm)
        x_p = jnp.zeros((npad, self.dp), jnp.float32).at[:n, : self.d].set(x_flat)
        noise_p = (
            jnp.zeros((npad, self.dp), jnp.float32).at[:n, : self.d].set(noise_flat)
        )

        logits_p = fused_forward(
            x_p, noise_p, self.w_folded_bf16, self.b_folded,
            tm=tm, tn=self.tn, tk=self.tk,
        )
        logits = logits_p[:n, : self.num_classes]
        return logits, noise_batch


if __name__ == "__main__":
    key = jax.random.PRNGKey(0)
    k_x, k_params = jax.random.split(key)

    batch = 2
    image_dim = 16        # scaled down from 224 for the example
    num_classes = 8

    x = jax.random.uniform(k_x, (batch, 3, image_dim, image_dim), jnp.float32)

    model = FreeATPallas(batch, image_dim, num_classes, k_params)
    logits, noise_batch = model(x)
    jax.block_until_ready((logits, noise_batch))

    # Reference check in plain JAX (un-fused, un-folded, f32).
    mean = jnp.asarray(IMAGENET_MEAN, jnp.float32)[None, :, None, None]
    std = jnp.asarray(IMAGENET_STD, jnp.float32)[None, :, None, None]
    in1_ref = (jnp.clip(x + noise_batch, 0.0, 1.0) - mean) / std
    logits_ref = in1_ref.reshape(batch, -1) @ model.w + model.b

    assert logits.shape == (batch, num_classes)
    assert noise_batch.shape == (batch, 3, image_dim, image_dim)
    assert jnp.allclose(noise_batch, 0.0)
    # bf16 MXU operands -> looser tolerance than the pure-f32 reference.
    assert jnp.allclose(logits, logits_ref, atol=5e-2, rtol=5e-2), float(
        jnp.max(jnp.abs(logits - logits_ref))
    )

    print("KERNEL_OK")
</pallas_src>

<mosaic_0001>
module attributes {stable_mosaic.version = 11 : i64} {
  func.func @_fused_freeat_kernel(%arg0: i32, %arg1: i32, %arg2: i32, %arg3: memref<8x256xf32, #tpu.memory_space<vmem>>, %arg4: memref<8x256xf32, #tpu.memory_space<vmem>>, %arg5: memref<256x128xbf16, #tpu.memory_space<vmem>>, %arg6: memref<1x128xf32, #tpu.memory_space<vmem>>, %arg7: memref<8x128xf32, #tpu.memory_space<vmem>>, %arg8: memref<8x128xf32, #tpu.memory_space<vmem>>) attributes {dimension_semantics = [#tpu.dimension_semantics<parallel>, #tpu.dimension_semantics<parallel>, #tpu.dimension_semantics<arbitrary>], iteration_bounds = array<i64: 1, 1, 3>, scalar_prefetch = 0 : i64, scratch_operands = 1 : i64, tpu.core_type = #tpu.core_type<tc>, window_params = [{transform_indices = @transform_0, window_bounds = array<i64: 8, 256>}, {transform_indices = @transform_1, window_bounds = array<i64: 8, 256>}, {transform_indices = @transform_2, window_bounds = array<i64: 256, 128>}, {transform_indices = @transform_3, window_bounds = array<i64: 1, 128>}, {transform_indices = @transform_4, window_bounds = array<i64: 8, 128>}]} {
    %c0_i32 = arith.constant 0 : i32
    %0 = arith.cmpi eq, %arg2, %c0_i32 : i32
    %1 = arith.extui %0 : i1 to i32
    %c0_i32_0 = arith.constant 0 : i32
    %2 = arith.cmpi ne, %1, %c0_i32_0 : i32
    scf.if %2 {
      %cst_13 = arith.constant 0.000000e+00 : f32
      %19 = vector.broadcast %cst_13 : f32 to vector<8x128xf32>
      %c0_14 = arith.constant 0 : index
      %c0_15 = arith.constant 0 : index
      %20 = vector.load %arg8[%c0_14, %c0_15] : memref<8x128xf32, #tpu.memory_space<vmem>>, vector<8x128xf32>
      tpu.vector_store %arg8[%c0_14, %c0_15], %19 {strides = array<i32>} : memref<8x128xf32, #tpu.memory_space<vmem>>, vector<8x128xf32>,
    } else {
    }
    %c0 = arith.constant 0 : index
    %c0_1 = arith.constant 0 : index
    %3 = vector.load %arg3[%c0, %c0_1] : memref<8x256xf32, #tpu.memory_space<vmem>>, vector<8x256xf32>
    %c0_2 = arith.constant 0 : index
    %c0_3 = arith.constant 0 : index
    %4 = vector.load %arg4[%c0_2, %c0_3] : memref<8x256xf32, #tpu.memory_space<vmem>>, vector<8x256xf32>
    %5 = arith.addf %3, %4 : vector<8x256xf32>
    %cst = arith.constant 0.000000e+00 : f32
    %cst_4 = arith.constant 1.000000e+00 : f32
    %6 = vector.broadcast %cst : f32 to vector<8x256xf32>
    %7 = arith.maximumf %6, %5 : vector<8x256xf32>
    %8 = vector.broadcast %cst_4 : f32 to vector<8x256xf32>
    %9 = arith.minimumf %8, %7 : vector<8x256xf32>
    %c0_5 = arith.constant 0 : index
    %c0_6 = arith.constant 0 : index
    %10 = vector.load %arg8[%c0_5, %c0_6] : memref<8x128xf32, #tpu.memory_space<vmem>>, vector<8x128xf32>
    %11 = arith.truncf %9 : vector<8x256xf32> to vector<8x256xbf16>
    %c0_7 = arith.constant 0 : index
    %c0_8 = arith.constant 0 : index
    %12 = vector.load %arg5[%c0_7, %c0_8] : memref<256x128xbf16, #tpu.memory_space<vmem>>, vector<256x128xbf16>
    %cst_9 = arith.constant dense<0.000000e+00> : vector<8x128xf32>
    %13 = tpu.matmul %11, %12, %cst_9 {dimension_numbers = #tpu.dot_dimension_numbers<[1], [0], [0], [1], [0, 0, 1, 1], [], []>} : vector<8x256xbf16>, vector<256x128xbf16>, vector<8x128xf32> -> vector<8x128xf32>
    %14 = arith.addf %10, %13 : vector<8x128xf32>
    %c0_10 = arith.constant 0 : index
    %c0_11 = arith.constant 0 : index
    %15 = vector.load %arg8[%c0_10, %c0_11] : memref<8x128xf32, #tpu.memory_space<vmem>>, vector<8x128xf32>
    tpu.vector_store %arg8[%c0_10, %c0_11], %14 {strides = array<i32>} : memref<8x128xf32, #tpu.memory_space<vmem>>, vector<8x128xf32>,
    %c2_i32 = arith.constant 2 : i32
    %16 = arith.cmpi eq, %arg2, %c2_i32 : i32
    %17 = arith.extui %16 : i1 to i32
    %c0_i32_12 = arith.constant 0 : i32
    %18 = arith.cmpi ne, %17, %c0_i32_12 : i32
    scf.if %18 {
      %c0_13 = arith.constant 0 : index
      %c0_14 = arith.constant 0 : index
      %19 = vector.load %arg8[%c0_13, %c0_14] : memref<8x128xf32, #tpu.memory_space<vmem>>, vector<8x128xf32>
      %c0_15 = arith.constant 0 : index
      %c0_16 = arith.constant 0 : index
      %20 = vector.load %arg6[%c0_15, %c0_16] : memref<1x128xf32, #tpu.memory_space<vmem>>, vector<1x128xf32>
      %21 = vector.broadcast %20 : vector<1x128xf32> to vector<8x128xf32>
      %22 = arith.addf %19, %21 : vector<8x128xf32>
      %c0_17 = arith.constant 0 : index
      %c0_18 = arith.constant 0 : index
      %23 = vector.load %arg7[%c0_17, %c0_18] : memref<8x128xf32, #tpu.memory_space<vmem>>, vector<8x128xf32>
      tpu.vector_store %arg7[%c0_17, %c0_18], %22 {strides = array<i32>} : memref<8x128xf32, #tpu.memory_space<vmem>>, vector<8x128xf32>,
    } else {
    }
    return
  }
  func.func @transform_0(%arg0: i32, %arg1: i32, %arg2: i32) -> (i32, i32) {
    %c0_i32 = arith.constant 0 : i32
    return %arg0, %arg2 : i32, i32
  }
  func.func @transform_1(%arg0: i32, %arg1: i32, %arg2: i32) -> (i32, i32) {
    %c0_i32 = arith.constant 0 : i32
    return %arg0, %arg2 : i32, i32
  }
  func.func @transform_2(%arg0: i32, %arg1: i32, %arg2: i32) -> (i32, i32) {
    %c0_i32 = arith.constant 0 : i32
    return %arg2, %arg1 : i32, i32
  }
  func.func @transform_3(%arg0: i32, %arg1: i32, %arg2: i32) -> (i32, i32) {
    %c0_i32 = arith.constant 0 : i32
    %c0_i32_0 = arith.constant 0 : i32
    return %c0_i32, %arg1 : i32, i32
  }
  func.func @transform_4(%arg0: i32, %arg1: i32, %arg2: i32) -> (i32, i32) {
    %c0_i32 = arith.constant 0 : i32
    return %arg0, %arg1 : i32, i32
  }
}

</mosaic_0001>

<llo_original>
// kernel: tpu_custom_call.1
$region0: #{tpu_custom_call.1}
  #allocation0 [shape = 'u32[]', space=smem, size = 0x4, offset = 0x4, fixed_abs, tag = 'smem constant byte address 0x4 - core index']
  #allocation1 [shape = 'u32[144,128]{1,0:T(1,128)}', space=vmem, size = 0x12000, scoped, tag = 'internal scratch']
  #allocation2 [shape = 'f32[8,128]{1,0:T(8,128)}', space=vmem, size = 0x1000, scoped, tag = 'scratch operand']
  %s0 = inlined_call_operand.hbm [shape: f32[8,768], index: 0, kind: input, shape index: {}]
  %s1 = inlined_call_operand.hbm [shape: f32[8,768], index: 1, kind: input, shape index: {}]
  %s2 = inlined_call_operand.hbm [shape: bf16[768,128], index: 2, kind: input, shape index: {}]
  %s3 = inlined_call_operand.vmem [shape: f32[1,128], index: 3, kind: input, shape index: {}]
  %s4 = inlined_call_operand.hbm [shape: f32[8,128], index: 4, kind: output, shape index: {}]
  %s5 = sld [smem:[#allocation0]]
  $region69: #{tpu_custom_call.1} parent=0
    _
  %s7 = ssub.s32 1, %s5
  %s8 = scalar_select 0, %s7, %s5
  $region1: #{tpu_custom_call.1} parent=0
    #allocation3 [shape = 'u8[16384]{0}', space=vmem, size = 0x4000, scoped, tag = 'input window, operand 0']
    #allocation4 [shape = 's32[2]{0}', space=sflag, size = 0x8, scoped, tag = 'scoped memory for tpu_custom_call.1']
    #allocation5 [shape = 's32[2]{0}', space=sflag, size = 0x8, scoped, tag = 'scoped memory for tpu_custom_call.1']
    #allocation6 [shape = 'u8[16384]{0}', space=vmem, size = 0x4000, scoped, tag = 'input window, operand 1']
    #allocation7 [shape = 's32[2]{0}', space=sflag, size = 0x8, scoped, tag = 'scoped memory for tpu_custom_call.1']
    #allocation8 [shape = 'u8[131072]{0}', space=vmem, size = 0x20000, scoped, tag = 'input window, operand 2']
    #allocation9 [shape = 'u8[4096]{0}', space=vmem, size = 0x1000, scoped, tag = 'output window, operand 0, single buffered']
    %9 = vsyncpa [#allocation4], 0
    %s10 = scalar_lea.sflag [#allocation4], 1
    %11 = vsyncpa %s10, 0
    %12 = vsyncpa [#allocation7], 0
    %s13 = scalar_lea.sflag [#allocation7], 1
    %14 = vsyncpa %s13, 0
    %15 = vsyncpa [#allocation5], 0
    loop: start=0, step=1, limit=5
    $region2: #{tpu_custom_call.1} parent=1 // loop_pre_header
      _
    $region3: #{tpu_custom_call.1} parent=1 // loop_header
      %s17 = sphi 0, %s21
      %p18 = scmp.ge.s32.totalorder %s17, 5
      %s24 = sphi 0, %s43
      %s25 = sphi 0, %s39
      %s26 = sphi 0, %s35
      %s27 = sphi 0, %s24
      %s28 = sphi 0, %s25
      %s29 = sphi 0, %s26
      %s30 = sphi 0, %s27
      %s31 = sphi 0, %s28
      %s32 = sphi 0, %s29
      %s48 = sphi 0, %s50
      %s51 = sphi 0, %s48
      %s52 = sphi 0, %s51
      %s68 = sphi 0, %s52
      %s76 = sphi 0, %s78
      %s79 = sphi 0, %s76
      %s80 = sphi 0, %s79
      %s96 = sphi 0, %s80
      %s104 = sphi 0, %s106
      %s107 = sphi 0, %s104
      %s108 = sphi 0, %s107
      %s124 = sphi 0, %s108
      %s130 = sphi 0, %s132
      %s133 = sphi 0, %s130
      %s134 = sphi 0, %s133
      %s150 = sphi 0, %s134
      %s158 = sphi 0, %s160
      %s161 = sphi 0, %s158
      %s162 = sphi 0, %s161
      %s178 = sphi 0, %s162
    $region4: #{tpu_custom_call.1} parent=1 // loop_header_branch
      %20 = sbr.rel (%p18) target = $region8
    $region5: #{tpu_custom_call.1} parent=1 // loop_body
      %s22 = ssub.s32 %s17, 1
      %s23 = ssub.s32 %s17, 2
      %s33 = sadd.s32 1, %s26
      %p34 = scmp.ge.s32.totalorder %s33, 3
      %s35 = scalar_select %p34, 0, %s33
      %s36 = sadd.s32 1, %s25
      %s37 = scalar_select %p34, %s36, %s25
      %p38 = scmp.ge.s32.totalorder %s37, 1
      %s39 = scalar_select %p38, 0, %s37
      %s40 = sadd.s32 1, %s24
      %s41 = scalar_select %p38, %s40, %s24
      %p42 = scmp.ge.s32.totalorder %s41, 1
      %s43 = scalar_select %p42, 0, %s41
      %s44 = ssub.s32 %s24, %s43
      %s45 = ssub.s32 %s26, %s35
      %s46 = sor.u32 %s44, %s45
      %p47 = scmp.eq.s32.totalorder %s46, 0
      %s49 = sadd.s32 %s48, 1
      %s50 = scalar_select %p47, %s48, %s49
      %p53 = pneg %p47
      %p54 = scmp.eq.s32.totalorder %s17, 2
      %p55 = por %p53, %p54
      %p56 = scmp.ne.s32.totalorder %s48, %s51
      %p57 = scmp.eq.s32.totalorder %s17, 0
      %p58 = por %p56, %p57
      %p59 = scmp.ne.s32.totalorder %s48, %s51
      %p60 = scmp.eq.s32.totalorder %s22, 2
      %p61 = por %p59, %p60
      %p62 = scmp.ne.s32.totalorder %s51, %s52
      %p63 = scmp.eq.s32.totalorder %s22, 0
      %p64 = por %p62, %p63
      %p65 = scmp.ne.s32.totalorder %s51, %s52
      %p66 = scmp.eq.s32.totalorder %s23, 2
      %p67 = por %p65, %p66
      %p69 = scmp.ne.s32.totalorder %s52, %s68
      %p70 = scmp.eq.s32.totalorder %s23, 0
      %p71 = por %p69, %p70
      %s72 = ssub.s32 %s24, %s43
      %s73 = ssub.s32 %s26, %s35
      %s74 = sor.u32 %s72, %s73
      %p75 = scmp.eq.s32.totalorder %s74, 0
      %s77 = sadd.s32 %s76, 1
      %s78 = scalar_select %p75, %s76, %s77
      %p81 = pneg %p75
      %p82 = scmp.eq.s32.totalorder %s17, 2
      %p83 = por %p81, %p82
      %p84 = scmp.ne.s32.totalorder %s76, %s79
      %p85 = scmp.eq.s32.totalorder %s17, 0
      %p86 = por %p84, %p85
      %p87 = scmp.ne.s32.totalorder %s76, %s79
      %p88 = scmp.eq.s32.totalorder %s22, 2
      %p89 = por %p87, %p88
      %p90 = scmp.ne.s32.totalorder %s79, %s80
      %p91 = scmp.eq.s32.totalorder %s22, 0
      %p92 = por %p90, %p91
      %p93 = scmp.ne.s32.totalorder %s79, %s80
      %p94 = scmp.eq.s32.totalorder %s23, 2
      %p95 = por %p93, %p94
      %p97 = scmp.ne.s32.totalorder %s80, %s96
      %p98 = scmp.eq.s32.totalorder %s23, 0
      %p99 = por %p97, %p98
      %s100 = ssub.s32 %s26, %s35
      %s101 = ssub.s32 %s25, %s39
      %s102 = sor.u32 %s100, %s101
      %p103 = scmp.eq.s32.totalorder %s102, 0
      %s105 = sadd.s32 %s104, 1
      %s106 = scalar_select %p103, %s104, %s105
      %p109 = pneg %p103
      %p110 = scmp.eq.s32.totalorder %s17, 2
      %p111 = por %p109, %p110
      %p112 = scmp.ne.s32.totalorder %s104, %s107
      %p113 = scmp.eq.s32.totalorder %s17, 0
      %p114 = por %p112, %p113
      %p115 = scmp.ne.s32.totalorder %s104, %s107
      %p116 = scmp.eq.s32.totalorder %s22, 2
      %p117 = por %p115, %p116
      %p118 = scmp.ne.s32.totalorder %s107, %s108
      %p119 = scmp.eq.s32.totalorder %s22, 0
      %p120 = por %p118, %p119
      %p121 = scmp.ne.s32.totalorder %s107, %s108
      %p122 = scmp.eq.s32.totalorder %s23, 2
      %p123 = por %p121, %p122
      %p125 = scmp.ne.s32.totalorder %s108, %s124
      %p126 = scmp.eq.s32.totalorder %s23, 0
      %p127 = por %p125, %p126
      %s128 = ssub.s32 %s25, %s39
      %p129 = scmp.eq.s32.totalorder %s128, 0
      %s131 = sadd.s32 %s130, 1
      %s132 = scalar_select %p129, %s130, %s131
      %p135 = pneg %p129
      %p136 = scmp.eq.s32.totalorder %s17, 2
      %p137 = por %p135, %p136
      %p138 = scmp.ne.s32.totalorder %s130, %s133
      %p139 = scmp.eq.s32.totalorder %s17, 0
      %p140 = por %p138, %p139
      %p141 = scmp.ne.s32.totalorder %s130, %s133
      %p142 = scmp.eq.s32.totalorder %s22, 2
      %p143 = por %p141, %p142
      %p144 = scmp.ne.s32.totalorder %s133, %s134
      %p145 = scmp.eq.s32.totalorder %s22, 0
      %p146 = por %p144, %p145
      %p147 = scmp.ne.s32.totalorder %s133, %s134
      %p148 = scmp.eq.s32.totalorder %s23, 2
      %p149 = por %p147, %p148
      %p151 = scmp.ne.s32.totalorder %s134, %s150
      %p152 = scmp.eq.s32.totalorder %s23, 0
      %p153 = por %p151, %p152
      %s154 = ssub.s32 %s24, %s43
      %s155 = ssub.s32 %s25, %s39
      %s156 = sor.u32 %s154, %s155
      %p157 = scmp.eq.s32.totalorder %s156, 0
      %s159 = sadd.s32 %s158, 1
      %s160 = scalar_select %p157, %s158, %s159
      %p163 = pneg %p157
      %p164 = scmp.eq.s32.totalorder %s17, 2
      %p165 = por %p163, %p164
      %p166 = scmp.ne.s32.totalorder %s158, %s161
      %p167 = scmp.eq.s32.totalorder %s17, 0
      %p168 = por %p166, %p167
      %p169 = scmp.ne.s32.totalorder %s158, %s161
      %p170 = scmp.eq.s32.totalorder %s22, 2
      %p171 = por %p169, %p170
      %p172 = scmp.ne.s32.totalorder %s161, %s162
      %p173 = scmp.eq.s32.totalorder %s22, 0
      %p174 = por %p172, %p173
      %p175 = scmp.ne.s32.totalorder %s161, %s162
      %p176 = scmp.eq.s32.totalorder %s23, 2
      %p177 = por %p175, %p176
      %p179 = scmp.ne.s32.totalorder %s162, %s178
      %p180 = scmp.eq.s32.totalorder %s23, 0
      %p181 = por %p179, %p180
      %p182 = scmp.le.s32.totalorder 1, %s17
      %p183 = scmp.lt.s32.totalorder %s17, 4
      %p184 = pnand %p182, %p183
      %p185 = pneg %p184
      // Predicated region
      $region9: #{tpu_custom_call.1} parent=5 // pred_check
        _
      $region10: #{tpu_custom_call.1} parent=5 // pred_check_branch
        %187 = sbr.rel (%p184) target = $region12
      $region11: #{tpu_custom_call.1} parent=5 // pred_region
        %s188 = ssub.s32 %s17, 1
        // Predicated region
        $region13: #{tpu_custom_call.1} parent=11 // pred_check
          %p189 = pneg %p146
        $region14: #{tpu_custom_call.1} parent=11 // pred_check_branch
          %191 = sbr.rel (%p189) target = $region16
        $region15: #{tpu_custom_call.1} parent=11 // pred_region
          %p192 = scmp.lt.s32.totalorder %s28, 0
          %s193 = scalar_select %p192, %s28, 0
          %s194 = scalar_lea.vmem %s3, %s193
        $region16: #{tpu_custom_call.1} parent=11 // pred_fallthru
          _
      $region12: #{tpu_custom_call.1} parent=5 // pred_fallthru
        _
      %p195 = scmp.lt.s32.totalorder %s17, 3
      // Predicated region
      $region17: #{tpu_custom_call.1} parent=5 // pred_check
        %p196 = pneg %p195
      $region18: #{tpu_custom_call.1} parent=5 // pred_check_branch
        %198 = sbr.rel (%p196) target = $region20
      $region19: #{tpu_custom_call.1} parent=5 // pred_region
        // Predicated region
        $region21: #{tpu_custom_call.1} parent=19 // pred_check
          %p199 = pneg %p58
        $region22: #{tpu_custom_call.1} parent=19 // pred_check_branch
          %201 = sbr.rel (%p199) target = $region24
        $region23: #{tpu_custom_call.1} parent=19 // pred_region
          %s202 = sand.u32 %s48, 1
          %s203 = scalar_lea.sflag [#allocation4], %s202
          %s204 = sand.u32 %s48, 1
          %s205 = smul.addr %s204, 16
          %s206 = scalar_lea.vmem [#allocation3], %s205
          %s207 = smul.u32 2, %s26
          %s209 = ssub.s32 256, 256
          %210 = vsyncadd %s203, %s209
          %s211 = smul.addr %s24, 6
          %s212 = sadd.s32 %s207, %s211
          %s213 = smul.addr %s212, 128
          %s214 = scalar_lea.hbm %s0, %s213
          %s216 = sshll.u32 %s206, 4
          %s217 = int_to_ptr.vmem [resolvable:$true] %s216
          %219 = dma.hbm_to_vmem [thread:$0]  %s214, 256, %s217, %s203
        $region24: #{tpu_custom_call.1} parent=19 // pred_fallthru
          _
        // Predicated region
        $region25: #{tpu_custom_call.1} parent=19 // pred_check
          %p220 = pneg %p86
        $region26: #{tpu_custom_call.1} parent=19 // pred_check_branch
          %222 = sbr.rel (%p220) target = $region28
        $region27: #{tpu_custom_call.1} parent=19 // pred_region
          %s223 = sand.u32 %s17, 1
          %s224 = scalar_lea.sflag [#allocation7], %s223
          %s225 = sand.u32 %s76, 1
          %s226 = smul.addr %s225, 16
          %s227 = scalar_lea.vmem [#allocation6], %s226
          %s228 = smul.u32 2, %s26
          %s230 = ssub.s32 256, 256
          %231 = vsyncadd %s224, %s230
          %s232 = smul.addr %s24, 6
          %s233 = sadd.s32 %s228, %s232
          %s234 = smul.addr %s233, 128
          %s235 = scalar_lea.hbm %s1, %s234
          %s237 = sshll.u32 %s227, 4
          %s238 = int_to_ptr.vmem [resolvable:$true] %s237
          %240 = dma.hbm_to_vmem [thread:$0]  %s235, 256, %s238, %s224
        $region28: #{tpu_custom_call.1} parent=19 // pred_fallthru
          _
        // Predicated region
        $region29: #{tpu_custom_call.1} parent=19 // pred_check
          %p241 = pneg %p114
        $region30: #{tpu_custom_call.1} parent=19 // pred_check_branch
          %243 = sbr.rel (%p241) target = $region32
        $region31: #{tpu_custom_call.1} parent=19 // pred_region
          %s244 = sand.u32 %s17, 1
          %s245 = scalar_lea.sflag [#allocation7], %s244
          %s246 = sand.u32 %s104, 1
          %s247 = smul.addr %s246, 128
          %s248 = scalar_lea.vmem [#allocation8], %s247
          %s249 = smul.u32 32, %s26
          %s251 = ssub.s32 2048, 2048
          %252 = vsyncadd %s245, %s251
          %s253 = sadd.s32 %s25, %s249
          %s254 = smul.addr %s253, 64
          %s255 = scalar_lea.hbm %s2, %s254
          %s256 = sshll.u32 %s248, 4
          %s257 = int_to_ptr.vmem [resolvable:$true] %s256
          %262 = dma.hbm_to_vmem [thread:$0]  %s255, 2048, %s257, %s245, 64, 64, 4
        $region32: #{tpu_custom_call.1} parent=19 // pred_fallthru
          _
      $region20: #{tpu_custom_call.1} parent=5 // pred_fallthru
        _
      %p263 = scmp.le.s32.totalorder 1, %s17
      %p264 = scmp.lt.s32.totalorder %s17, 4
      %p265 = pnand %p263, %p264
      %p266 = pneg %p265
      // Predicated region
      $region33: #{tpu_custom_call.1} parent=5 // pred_check
        _
      $region34: #{tpu_custom_call.1} parent=5 // pred_check_branch
        %268 = sbr.rel (%p265) target = $region36
      $region35: #{tpu_custom_call.1} parent=5 // pred_region
        %s269 = ssub.s32 %s17, 1
        %s270 = sand.u32 %s51, 1
        %s271 = scalar_lea.sflag [#allocation4], %s270
        %s272 = sand.u32 %s51, 1
        %s273 = smul.addr %s272, 16
        %s274 = scalar_lea.vmem [#allocation3], %s273
        // Predicated region
        $region37: #{tpu_custom_call.1} parent=35 // pred_check
          %p275 = pneg %p64
        $region38: #{tpu_custom_call.1} parent=35 // pred_check_branch
          %277 = sbr.rel (%p275) target = $region40
        $region39: #{tpu_custom_call.1} parent=35 // pred_region
          %278 = dma.done %s271, 256
        $region40: #{tpu_custom_call.1} parent=35 // pred_fallthru
          _
        %s279 = sand.u32 %s22, 1
        %s280 = scalar_lea.sflag [#allocation7], %s279
        %s281 = sand.u32 %s79, 1
        %s282 = smul.addr %s281, 16
        %s283 = scalar_lea.vmem [#allocation6], %s282
        // Predicated region
        $region41: #{tpu_custom_call.1} parent=35 // pred_check
          %p284 = pneg %p92
        $region42: #{tpu_custom_call.1} parent=35 // pred_check_branch
          %286 = sbr.rel (%p284) target = $region44
        $region43: #{tpu_custom_call.1} parent=35 // pred_region
          %287 = dma.done %s280, 256
        $region44: #{tpu_custom_call.1} parent=35 // pred_fallthru
          _
        %s288 = sand.u32 %s22, 1
        %s289 = scalar_lea.sflag [#allocation7], %s288
        %s290 = sand.u32 %s107, 1
        %s291 = smul.addr %s290, 128
        %s292 = scalar_lea.vmem [#allocation8], %s291
        // Predicated region
        $region45: #{tpu_custom_call.1} parent=35 // pred_check
          %p293 = pneg %p120
        $region46: #{tpu_custom_call.1} parent=35 // pred_check_branch
          %295 = sbr.rel (%p293) target = $region48
        $region47: #{tpu_custom_call.1} parent=35 // pred_region
          %296 = dma.done %s289, 2048
        $region48: #{tpu_custom_call.1} parent=35 // pred_fallthru
          _
        %s297 = sand.u32 %s51, 1
        %s298 = scalar_lea.sflag [#allocation4], %s297
        %s299 = sand.u32 %s51, 1
        %s300 = smul.addr %s299, 16
        %s301 = scalar_lea.vmem [#allocation3], %s300
        %p302 = pneg %p64
        %p303 = pneg %p61
        %s304 = sand.u32 %s22, 1
        %s305 = scalar_lea.sflag [#allocation7], %s304
        %s306 = sand.u32 %s79, 1
        %s307 = smul.addr %s306, 16
        %s308 = scalar_lea.vmem [#allocation6], %s307
        %p309 = pneg %p92
        %p310 = pneg %p89
        %s311 = sand.u32 %s22, 1
        %s312 = scalar_lea.sflag [#allocation7], %s311
        %s313 = sand.u32 %s107, 1
        %s314 = smul.addr %s313, 128
        %s315 = scalar_lea.vmem [#allocation8], %s314
        %p316 = pneg %p120
        %p317 = pneg %p117
        %p318 = scmp.lt.s32.totalorder %s28, 0
        %s319 = scalar_select %p318, %s28, 0
        %s320 = scalar_lea.vmem %s3, %s319
        %p321 = pneg %p146
        %p322 = pneg %p143
        %p323 = pneg %p174
        %p324 = pneg %p171
        %s325 = smul.u32 2, %s29
        %s326 = smul.u32 2, %s29
        %s327 = smul.u32 32, %s29
        %p328 = scmp.lt.s32.totalorder %s28, 0
        %s329 = scalar_select %p328, %s28, 0
        %s330 = scalar_lea.vmem %s3, %s329
        %p332 = scmp.eq.s32.totalorder %s29, 0
        // Predicated region
        $region49: #{tpu_custom_call.1} parent=35 // pred_check
          %p333 = pneg %p332
        $region50: #{tpu_custom_call.1} parent=35 // pred_check_branch
          %335 = sbr.rel (%p333) target = $region52
        $region51: #{tpu_custom_call.1} parent=35 // pred_region
          %336 = vst [vmem:[#allocation2] sm:$0xff] 0.0
        $region52: #{tpu_custom_call.1} parent=35 // pred_fallthru
          _
        %v337 = vld [vmem:[%s274] sm:$0xff]
        %v338 = vld [vmem:[%s274 + $0x8] sm:$0xff]
        %v339 = vld [vmem:[%s283] sm:$0xff]
        %v340 = vld [vmem:[%s283 + $0x8] sm:$0xff]
        %v341 = vadd.f32 %v337, %v339
        %v342 = vadd.f32 %v338, %v340
        %v343 = vmax.f32 %v341, 0.0
        %v344 = vmax.f32 %v342, 0.0
        %v345 = vmin.f32 %v343, 1.0
        %v346 = vmin.f32 %v344, 1.0
        %v347 = vld [vmem:[#allocation2] sm:$0xff]
        %v348 = vpack.c.bf16 %v345, %v345
        %v349 = vpack.c.bf16 %v346, %v346
        %v350 = vld [vmem:[%s292] sm:$0xf]
        %v351 = vld [vmem:[%s292 + $0x4] sm:$0xf]
        %v352 = vld [vmem:[%s292 + $0x8] sm:$0xf]
        %v353 = vld [vmem:[%s292 + $0xc] sm:$0xf]
        %v354 = vld [vmem:[%s292 + $0x10] sm:$0xf]
        %v355 = vld [vmem:[%s292 + $0x14] sm:$0xf]
        %v356 = vld [vmem:[%s292 + $0x18] sm:$0xf]
        %v357 = vld [vmem:[%s292 + $0x1c] sm:$0xf]
        %v358 = vld [vmem:[%s292 + $0x20] sm:$0xf]
        %v359 = vld [vmem:[%s292 + $0x24] sm:$0xf]
        %v360 = vld [vmem:[%s292 + $0x28] sm:$0xf]
        %v361 = vld [vmem:[%s292 + $0x2c] sm:$0xf]
        %v362 = vld [vmem:[%s292 + $0x30] sm:$0xf]
        %v363 = vld [vmem:[%s292 + $0x34] sm:$0xf]
        %v364 = vld [vmem:[%s292 + $0x38] sm:$0xf]
        %v365 = vld [vmem:[%s292 + $0x3c] sm:$0xf]
        %v366 = vld [vmem:[%s292 + $0x40] sm:$0xf]
        %v367 = vld [vmem:[%s292 + $0x44] sm:$0xf]
        %v368 = vld [vmem:[%s292 + $0x48] sm:$0xf]
        %v369 = vld [vmem:[%s292 + $0x4c] sm:$0xf]
        %v370 = vld [vmem:[%s292 + $0x50] sm:$0xf]
        %v371 = vld [vmem:[%s292 + $0x54] sm:$0xf]
        %v372 = vld [vmem:[%s292 + $0x58] sm:$0xf]
        %v373 = vld [vmem:[%s292 + $0x5c] sm:$0xf]
        %v374 = vld [vmem:[%s292 + $0x60] sm:$0xf]
        %v375 = vld [vmem:[%s292 + $0x64] sm:$0xf]
        %v376 = vld [vmem:[%s292 + $0x68] sm:$0xf]
        %v377 = vld [vmem:[%s292 + $0x6c] sm:$0xf]
        %v378 = vld [vmem:[%s292 + $0x70] sm:$0xf]
        %v379 = vld [vmem:[%s292 + $0x74] sm:$0xf]
        %v380 = vld [vmem:[%s292 + $0x78] sm:$0xf]
        %v381 = vld [vmem:[%s292 + $0x7c] sm:$0xf]
        %v414 = vunpack.c.l.b16 %v350
        %v415 = vunpack.c.l.b16 %v351
        %v416 = vunpack.c.l.b16 %v352
        %v417 = vunpack.c.l.b16 %v353
        %v418 = vunpack.c.l.b16 %v354
        %v419 = vunpack.c.l.b16 %v355
        %v420 = vunpack.c.l.b16 %v356
        %v421 = vunpack.c.l.b16 %v357
        %v422 = vunpack.c.l.b16 %v358
        %v423 = vunpack.c.l.b16 %v359
        %v424 = vunpack.c.l.b16 %v360
        %v425 = vunpack.c.l.b16 %v361
        %v426 = vunpack.c.l.b16 %v362
        %v427 = vunpack.c.l.b16 %v363
        %v428 = vunpack.c.l.b16 %v364
        %v429 = vunpack.c.l.b16 %v365
        %v430 = vunpack.c.l.b16 %v366
        %v431 = vunpack.c.l.b16 %v367
        %v432 = vunpack.c.l.b16 %v368
        %v433 = vunpack.c.l.b16 %v369
        %v434 = vunpack.c.l.b16 %v370
        %v435 = vunpack.c.l.b16 %v371
        %v436 = vunpack.c.l.b16 %v372
        %v437 = vunpack.c.l.b16 %v373
        %v438 = vunpack.c.l.b16 %v374
        %v439 = vunpack.c.l.b16 %v375
        %v440 = vunpack.c.l.b16 %v376
        %v441 = vunpack.c.l.b16 %v377
        %v442 = vunpack.c.l.b16 %v378
        %v443 = vunpack.c.l.b16 %v379
        %v444 = vunpack.c.l.b16 %v380
        %v445 = vunpack.c.l.b16 %v381
        %v446 = vpack.c.b16 %v415, %v414
        %v447 = vpack.c.b16 %v417, %v416
        %v448 = vpack.c.b16 %v419, %v418
        %v449 = vpack.c.b16 %v421, %v420
        %v450 = vpack.c.b16 %v423, %v422
        %v451 = vpack.c.b16 %v425, %v424
        %v452 = vpack.c.b16 %v427, %v426
        %v453 = vpack.c.b16 %v429, %v428
        %v454 = vpack.c.b16 %v431, %v430
        %v455 = vpack.c.b16 %v433, %v432
        %v456 = vpack.c.b16 %v435, %v434
        %v457 = vpack.c.b16 %v437, %v436
        %v458 = vpack.c.b16 %v439, %v438
        %v459 = vpack.c.b16 %v441, %v440
        %v460 = vpack.c.b16 %v443, %v442
        %v461 = vpack.c.b16 %v445, %v444
        %478 = vmatprep.subr.bf16.mxu0 0
        %479 = vmatpush1.bf16.msra.mxu0 %v446
        %480 = vmatprep.subr.bf16.mxu0 0
        %481 = vmatpush1.bf16.msra.mxu0 %v447
        %482 = vmatprep.subr.bf16.mxu0 0
        %483 = vmatpush1.bf16.msra.mxu0 %v448
        %484 = vmatprep.subr.bf16.mxu0 0
        %485 = vmatpush1.bf16.msra.mxu0 %v449
        %486 = vmatprep.subr.bf16.mxu0 0
        %487 = vmatpush1.bf16.msra.mxu0 %v450
        %488 = vmatprep.subr.bf16.mxu0 0
        %489 = vmatpush1.bf16.msra.mxu0 %v451
        %490 = vmatprep.subr.bf16.mxu0 0
        %491 = vmatpush1.bf16.msra.mxu0 %v452
        %492 = vmatprep.subr.bf16.mxu0 0
        %493 = vmatpush1.bf16.msra.mxu0 %v453
        %494 = vmatprep.subr.bf16.mxu0 0
        %495 = vmatpush1.bf16.msra.mxu0 %v454
        %496 = vmatprep.subr.bf16.mxu0 0
        %497 = vmatpush1.bf16.msra.mxu0 %v455
        %498 = vmatprep.subr.bf16.mxu0 0
        %499 = vmatpush1.bf16.msra.mxu0 %v456
        %500 = vmatprep.subr.bf16.mxu0 0
        %501 = vmatpush1.bf16.msra.mxu0 %v457
        %502 = vmatprep.subr.bf16.mxu0 0
        %503 = vmatpush1.bf16.msra.mxu0 %v458
        %504 = vmatprep.subr.bf16.mxu0 0
        %505 = vmatpush1.bf16.msra.mxu0 %v459
        %506 = vmatprep.subr.bf16.mxu0 0
        %507 = vmatpush1.bf16.msra.mxu0 %v460
        %508 = vmatprep.subr.bf16.mxu0 0
        %509 = vmatpush1.bf16.msra.mxu0 %v461
        %510 = vmatprep.mubr.bf16.mxu0 %v349
        %511 = vmatmul.mubr.bf16.gmra.mrb[0].mxu0 %v348
        %v512 = vpop.f32.mrb[0].mxu0
        %v513 = vadd.f32 0.0, %v512
        %v514 = vpop.f32.mrb[0].mxu0
        %v515 = vpop.f32.mrb[0].mxu0
        %v516 = vpop.f32.mrb[0].mxu0
        %517 = vdwg.mxu0
        %v518 = vadd.f32 %v347, %v513
        %519 = vst [vmem:[#allocation2] sm:$0xff] %v518
        %p520 = scmp.eq.s32.totalorder %s29, 2
        // Predicated region
        $region53: #{tpu_custom_call.1} parent=35 // pred_check
          %p521 = pneg %p520
        $region54: #{tpu_custom_call.1} parent=35 // pred_check_branch
          %523 = sbr.rel (%p521) target = $region56
        $region55: #{tpu_custom_call.1} parent=35 // pred_region
          %v524 = vld [vmem:[#allocation2] sm:$0xff]
          %v525 = vld [vmem:[%s330] sm:$0x1]
          %v527 = vlaneseq
          %v528 = vshrl.u32 %v527, 7
          %v529 = vsub.s32 0, %v528
          %v530 = vrot.slane %v525, %v529
          %v532 = vadd.f32 %v524, %v530
          %533 = vst [vmem:[#allocation9] sm:$0xff] %v532
        $region56: #{tpu_custom_call.1} parent=35 // pred_fallthru
          _
        // Predicated region
        $region57: #{tpu_custom_call.1} parent=35 // pred_check
          %p534 = pneg %p171
        $region58: #{tpu_custom_call.1} parent=35 // pred_check_branch
          %536 = sbr.rel (%p534) target = $region60
        $region59: #{tpu_custom_call.1} parent=35 // pred_region
          %s538 = ssub.s32 128, 128
          %539 = vsyncadd [#allocation5], %s538
          %s540 = sadd.s32 %s28, %s27
          %s541 = smul.addr %s540, 128
          %s542 = scalar_lea.hbm %s4, %s541
          %s544 = sshll.u32 [#allocation9], 4
          %s545 = int_to_ptr.vmem [resolvable:$true] %s544
          %547 = dma.vmem_to_hbm [thread:$0]  %s545, 128, %s542, [#allocation5]
        $region60: #{tpu_custom_call.1} parent=35 // pred_fallthru
          _
        // Predicated region
        $region61: #{tpu_custom_call.1} parent=35 // pred_check
          %p548 = pneg %p171
        $region62: #{tpu_custom_call.1} parent=35 // pred_check_branch
          %550 = sbr.rel (%p548) target = $region64
        $region63: #{tpu_custom_call.1} parent=35 // pred_region
          %551 = dma.done [#allocation5], 128
        $region64: #{tpu_custom_call.1} parent=35 // pred_fallthru
          _
      $region36: #{tpu_custom_call.1} parent=5 // pred_fallthru
        _
      %p552 = scmp.le.s32.totalorder 2, %s17
      // Predicated region
      $region65: #{tpu_custom_call.1} parent=5 // pred_check
        %p553 = pneg %p552
      $region66: #{tpu_custom_call.1} parent=5 // pred_check_branch
        %555 = sbr.rel (%p553) target = $region68
      $region67: #{tpu_custom_call.1} parent=5 // pred_region
        %s556 = ssub.s32 %s17, 2
      $region68: #{tpu_custom_call.1} parent=5 // pred_fallthru
        _
    $region6: #{tpu_custom_call.1} parent=1 // loop_footer
      %s21 = sadd.s32 1, %s17
    $region7: #{tpu_custom_call.1} parent=1 // loop_footer_branch
      %16 = sbr.rel target = $region3
    $region8: #{tpu_custom_call.1} parent=1 // loop_exit
      _
    %557 = vsyncpa [#allocation4], 1
    %s558 = scalar_lea.sflag [#allocation4], 1
    %559 = vsyncpa %s558, 1
    %560 = vsyncpa [#allocation7], 1
    %s561 = scalar_lea.sflag [#allocation7], 1
    %562 = vsyncpa %s561, 1
    %563 = vsyncpa [#allocation5], 1
    %s564 = scalar_lea.sflag [#allocation5], 1
    %565 = vsyncpa %s564, 1

</llo_original>
